<compile_context>
chip_gen: v5e
topology: v5e:2x2
jax: 0.10.0
libtpu: 0.0.40
codegen_flags: <defaults>
</compile_context>

<pallas_src>
import math

import jax
import jax.numpy as jnp
from jax import lax
from jax.experimental import pallas as pl
from jax.experimental.pallas import tpu as pltpu


def _round_up(x: int, m: int) -> int:
    return ((x + m - 1) // m) * m


def _cdiv(a: int, b: int) -> int:
    return (a + b - 1) // b


def _pick_d_tile(D: int, d_tile: int) -> int:
    """Largest multiple of 128 <= d_tile that divides D, else D (no tiling)."""
    if D <= d_tile or D % 128 != 0:
        return D
    t = (d_tile // 128) * 128
    while t >= 128:
        if D % t == 0:
            return t
        t -= 128
    return D


def _mlp_kernel(x_ref, w1b_ref, w2_ref, b2_ref, o_ref):
    # Per-grid-step views:
    #   x_ref  : (TN, S0)     rows of flattened input (f32)
    #   w1b_ref: (S0+1, D)    [W1^T ; b1] packed, one constant DMA (f32)
    #   w2_ref : (D, TD)      W2^T tile in (in, out) layout -> plain (1,0) dot
    #   b2_ref : (1, TD)      second-Linear bias tile (f32)
    #   o_ref  : (TN, TD)     output rows (lane-dense, TD multiple of 128)
    x = x_ref[...]                          # (TN, S0)
    s0 = x.shape[1]
    w1 = w1b_ref[0:s0, :]                   # (S0, D)
    b1 = w1b_ref[s0:s0 + 1, :]              # (1, D)

    # First Linear.  src_dim is tiny (typically 1) -> VPU broadcast-multiply
    # instead of a degenerate K=1 MXU matmul; switch to the MXU if src_dim grows.
    if s0 > 8:
        acc = jnp.dot(x, w1, preferred_element_type=jnp.float32)
    else:
        acc = x[:, 0:1] * w1[0:1, :]        # (TN, D)
        for k in range(1, s0):              # static, src_dim is small
            acc = acc + x[:, k:k + 1] * w1[k:k + 1, :]
    h = jnp.maximum(acc + b1, 0.0)          # ReLU, (TN, D), f32

    # Second Linear on the MXU: standard (1,0) contraction against W2^T tile,
    # no in-kernel transpose.  If W2 is streamed in bf16, cast h only here
    # (layer-1 VPU math stays f32 for v5e); accumulate in f32.
    w2 = w2_ref[...]                        # (D, TD)
    out = jnp.dot(h.astype(w2.dtype), w2, preferred_element_type=jnp.float32)
    o_ref[...] = (out + b2_ref[...]).astype(o_ref.dtype)


def real_embedding_forward(x, params, *, row_tile=512, d_tile=512,
                           min_row_tiles=1, weight_dtype=jnp.float32,
                           out_dtype=jnp.float32):
    """x: (..., src_dim) float; params = (W1, b1, W2, b2) with PyTorch layouts
    W1:(D,src_dim) b1:(D,) W2:(D,D) b2:(D,).  Returns (..., D) in out_dtype.

    min_row_tiles: set to 2 on v7x for large N so both TensorCores get a tile.
    weight_dtype:  jnp.bfloat16 halves W2 HBM/VMEM bytes (precision tradeoff).
    """
    W1, b1, W2, b2 = params
    D, S0 = W1.shape
    assert x.shape[-1] == S0, (x.shape, S0)

    lead = x.shape[:-1]
    N = int(math.prod(lead)) if lead else 1

    xf = x.reshape(N, S0).astype(jnp.float32)

    # Balanced row tiling: at most 7 pad rows per tile, not up to TN-1 total.
    num_tiles = max(int(min_row_tiles), _cdiv(N, row_tile))
    num_tiles = max(1, min(num_tiles, _cdiv(N, 8)))
    TN = _round_up(_cdiv(N, num_tiles), 8)
    N_pad = _round_up(N, TN)
    if N_pad != N:
        xf = jnp.pad(xf, ((0, N_pad - N), (0, 0)))
    grid_n = N_pad // TN

    # Output-feature tiling of W2 (caps resident weight VMEM at D*TD bytes).
    TD = _pick_d_tile(D, d_tile)
    grid_d = D // TD
    single_d = grid_d == 1

    # Weights: pack [W1^T ; b1] into one constant block; W2^T in (in, out)
    # layout so the kernel dot needs no transpose anywhere.
    w1b = jnp.concatenate(
        [W1.T.astype(jnp.float32), b1.reshape(1, D).astype(jnp.float32)],
        axis=0)                                           # (S0+1, D)
    w2t = W2.T.astype(weight_dtype)                       # (D, D) (in, out)
    b2m = b2.reshape(1, D).astype(jnp.float32)            # (1, D)

    out_isz = jnp.dtype(out_dtype).itemsize
    w2_isz = jnp.dtype(weight_dtype).itemsize

    # VMEM budget from the actual (tile-padded) footprint, with headroom.
    def _pad2(r, c, isz):
        return _round_up(max(r, 1), 8) * _round_up(max(c, 1), 128) * isz

    w2_bufs = 1 if single_d else 2
    vmem_bytes = (
        2 * _pad2(TN, S0, 4) +                 # x double buffer
        2 * _pad2(TN, TD, out_isz) +           # out double buffer
        1 * _pad2(S0 + 1, D, 4) +              # w1b (single-buffered)
        w2_bufs * _pad2(D, TD, w2_isz) +       # W2^T tile(s)
        w2_bufs * _pad2(1, TD, 4))             # b2 tile(s)
    vmem_limit = int(min(64 << 20, max(16 << 20, int(vmem_bytes * 1.5) + (4 << 20))))

    cost = pl.CostEstimate(
        flops=2 * N_pad * S0 * D + 2 * N_pad * D * D + 2 * N_pad * D,
        transcendentals=0,
        bytes_accessed=(N_pad * S0 * 4 + (S0 + 1) * D * 4 +
                        D * D * w2_isz + D * 4 + N_pad * D * out_isz))

    # Constant / weight operands: single-buffer when they are never re-fetched.
    w1b_spec = pl.BlockSpec((S0 + 1, D), lambda j, i: (0, 0),
                            pipeline_mode=pl.Buffered(1))
    if single_d:
        w2_spec = pl.BlockSpec((D, TD), lambda j, i: (0, j),
                               pipeline_mode=pl.Buffered(1))
        b2_spec = pl.BlockSpec((1, TD), lambda j, i: (0, j),
                               pipeline_mode=pl.Buffered(1))
    else:
        w2_spec = pl.BlockSpec((D, TD), lambda j, i: (0, j))
        b2_spec = pl.BlockSpec((1, TD), lambda j, i: (0, j))

    out = pl.pallas_call(
        _mlp_kernel,
        out_shape=jax.ShapeDtypeStruct((N_pad, D), out_dtype),
        grid_spec=pltpu.PrefetchScalarGridSpec(
            num_scalar_prefetch=0,
            grid=(grid_d, grid_n),          # j outer (W2 tile), i inner (rows)
            in_specs=[
                pl.BlockSpec((TN, S0), lambda j, i: (i, 0)),
                w1b_spec,
                w2_spec,
                b2_spec,
            ],
            out_specs=pl.BlockSpec((TN, TD), lambda j, i: (i, j)),
        ),
        compiler_params=pltpu.CompilerParams(
            dimension_semantics=("parallel", "parallel"),
            vmem_limit_bytes=vmem_limit),
        cost_estimate=cost,
    )(xf, w1b, w2t, b2m)

    # Padded rows hold garbage (relu(b1) @ W2^T + b2) -> slice them off.
    return out[:N].reshape(*lead, D)


def init_params(key, embedding_dim, src_dim=1):
    """nn.Linear-style init: U[-1/sqrt(fan_in), 1/sqrt(fan_in)]."""
    D = embedding_dim
    k1, k2, k3, k4 = jax.random.split(key, 4)
    bound1 = 1.0 / math.sqrt(src_dim)
    bound2 = 1.0 / math.sqrt(D)
    W1 = jax.random.uniform(k1, (D, src_dim), jnp.float32, -bound1, bound1)
    b1 = jax.random.uniform(k2, (D,), jnp.float32, -bound1, bound1)
    W2 = jax.random.uniform(k3, (D, D), jnp.float32, -bound2, bound2)
    b2 = jax.random.uniform(k4, (D,), jnp.float32, -bound2, bound2)
    return W1, b1, W2, b2


def reference_forward(x, params):
    """Pure-JAX f32 reference of the PyTorch module."""
    W1, b1, W2, b2 = params
    h = jnp.maximum(
        jnp.einsum('...k,dk->...d', x, W1, precision=lax.Precision.HIGHEST) + b1,
        0.0)
    return jnp.einsum('...e,de->...d', h, W2,
                      precision=lax.Precision.HIGHEST) + b2


if __name__ == "__main__":
    key = jax.random.PRNGKey(0)
    kx, kp, kx2, kp2 = jax.random.split(key, 4)

    # Test 1: baseline shape (grid = (1, 1)), exact f32 path.
    B, S, SRC, D = 2, 8, 1, 128
    x = jax.random.normal(kx, (B, S, SRC), dtype=jnp.float32)
    params = init_params(kp, D, SRC)
    out = jax.block_until_ready(real_embedding_forward(x, params))
    ref = reference_forward(x, params)
    assert out.shape == (B, S, D), out.shape
    assert jnp.allclose(out, ref, atol=1e-4, rtol=1e-4), \
        float(jnp.max(jnp.abs(out - ref)))

    # Test 2: multi row-tile with padding (N=200, not a multiple of TN) and a
    # tiled W2 output axis (D=256, d_tile=128 -> grid=(2, 4)).
    B2, S2, SRC2, D2 = 8, 25, 1, 256
    x2 = jax.random.normal(kx2, (B2, S2, SRC2), dtype=jnp.float32)
    params2 = init_params(kp2, D2, SRC2)
    out2 = jax.block_until_ready(
        real_embedding_forward(x2, params2, row_tile=64, d_tile=128))
    ref2 = reference_forward(x2, params2)
    assert out2.shape == (B2, S2, D2), out2.shape
    assert jnp.allclose(out2, ref2, atol=5e-4, rtol=5e-4), \
        float(jnp.max(jnp.abs(out2 - ref2)))

    # Test 3: bf16-streamed W2 (accepted precision tradeoff -> looser tolerance).
    out3 = jax.block_until_ready(
        real_embedding_forward(x, params, weight_dtype=jnp.bfloat16))
    assert jnp.allclose(out3, ref, atol=5e-2, rtol=5e-2), \
        float(jnp.max(jnp.abs(out3 - ref)))

    print("KERNEL_OK")
</pallas_src>

<mosaic_0001>
module attributes {stable_mosaic.version = 11 : i64} {
  func.func @_mlp_kernel(%arg0: i32, %arg1: i32, %arg2: memref<16x1xf32, #tpu.memory_space<vmem>>, %arg3: memref<2x128xf32, #tpu.memory_space<vmem>>, %arg4: memref<128x128xf32, #tpu.memory_space<vmem>>, %arg5: memref<1x128xf32, #tpu.memory_space<vmem>>, %arg6: memref<16x128xf32, #tpu.memory_space<vmem>>) attributes {dimension_semantics = [#tpu.dimension_semantics<parallel>, #tpu.dimension_semantics<parallel>], iteration_bounds = array<i64: 1, 1>, scalar_prefetch = 0 : i64, scratch_operands = 0 : i64, tpu.core_type = #tpu.core_type<tc>, window_params = [{transform_indices = @transform_0, window_bounds = array<i64: 16, 1>}, {pipeline_mode = #tpu.pipeline_mode<synchronous>, transform_indices = @transform_1, window_bounds = array<i64: 2, 128>}, {pipeline_mode = #tpu.pipeline_mode<synchronous>, transform_indices = @transform_2, window_bounds = array<i64: 128, 128>}, {pipeline_mode = #tpu.pipeline_mode<synchronous>, transform_indices = @transform_3, window_bounds = array<i64: 1, 128>}, {transform_indices = @transform_4, window_bounds = array<i64: 16, 128>}]} {
    %c0 = arith.constant 0 : index
    %c0_0 = arith.constant 0 : index
    %0 = vector.load %arg2[%c0, %c0_0] : memref<16x1xf32, #tpu.memory_space<vmem>>, vector<16x1xf32>
    %c0_1 = arith.constant 0 : index
    %c0_2 = arith.constant 0 : index
    %1 = vector.load %arg3[%c0_1, %c0_2] : memref<2x128xf32, #tpu.memory_space<vmem>>, vector<1x128xf32>
    %c1 = arith.constant 1 : index
    %c0_3 = arith.constant 0 : index
    %2 = vector.load %arg3[%c1, %c0_3] : memref<2x128xf32, #tpu.memory_space<vmem>>, vector<1x128xf32>
    %3 = vector.broadcast %0 : vector<16x1xf32> to vector<16x128xf32>
    %4 = vector.broadcast %1 : vector<1x128xf32> to vector<16x128xf32>
    %5 = arith.mulf %3, %4 : vector<16x128xf32>
    %6 = vector.broadcast %2 : vector<1x128xf32> to vector<16x128xf32>
    %7 = arith.addf %5, %6 : vector<16x128xf32>
    %cst = arith.constant 0.000000e+00 : f32
    %8 = vector.broadcast %cst : f32 to vector<16x128xf32>
    %9 = arith.maximumf %7, %8 : vector<16x128xf32>
    %c0_4 = arith.constant 0 : index
    %c0_5 = arith.constant 0 : index
    %10 = vector.load %arg4[%c0_4, %c0_5] : memref<128x128xf32, #tpu.memory_space<vmem>>, vector<128x128xf32>
    %cst_6 = arith.constant dense<0.000000e+00> : vector<16x128xf32>
    %11 = tpu.matmul %9, %10, %cst_6 {dimension_numbers = #tpu.dot_dimension_numbers<[1], [0], [0], [1], [0, 0, 1, 1], [], []>} : vector<16x128xf32>, vector<128x128xf32>, vector<16x128xf32> -> vector<16x128xf32>
    %c0_7 = arith.constant 0 : index
    %c0_8 = arith.constant 0 : index
    %12 = vector.load %arg5[%c0_7, %c0_8] : memref<1x128xf32, #tpu.memory_space<vmem>>, vector<1x128xf32>
    %13 = vector.broadcast %12 : vector<1x128xf32> to vector<16x128xf32>
    %14 = arith.addf %11, %13 : vector<16x128xf32>
    %c0_9 = arith.constant 0 : index
    %c0_10 = arith.constant 0 : index
    %15 = vector.load %arg6[%c0_9, %c0_10] : memref<16x128xf32, #tpu.memory_space<vmem>>, vector<16x128xf32>
    tpu.vector_store %arg6[%c0_9, %c0_10], %14 {strides = array<i32>} : memref<16x128xf32, #tpu.memory_space<vmem>>, vector<16x128xf32>,
    return
  }
  func.func @transform_0(%arg0: i32, %arg1: i32) -> (i32, i32) {
    %c0_i32 = arith.constant 0 : i32
    %c0_i32_0 = arith.constant 0 : i32
    return %arg1, %c0_i32 : i32, i32
  }
  func.func @transform_1(%arg0: i32, %arg1: i32) -> (i32, i32) {
    %c0_i32 = arith.constant 0 : i32
    %c0_i32_0 = arith.constant 0 : i32
    %c0_i32_1 = arith.constant 0 : i32
    return %c0_i32, %c0_i32_0 : i32, i32
  }
  func.func @transform_2(%arg0: i32, %arg1: i32) -> (i32, i32) {
    %c0_i32 = arith.constant 0 : i32
    %c0_i32_0 = arith.constant 0 : i32
    return %c0_i32, %arg0 : i32, i32
  }
  func.func @transform_3(%arg0: i32, %arg1: i32) -> (i32, i32) {
    %c0_i32 = arith.constant 0 : i32
    %c0_i32_0 = arith.constant 0 : i32
    return %c0_i32, %arg0 : i32, i32
  }
  func.func @transform_4(%arg0: i32, %arg1: i32) -> (i32, i32) {
    %c0_i32 = arith.constant 0 : i32
    return %arg1, %arg0 : i32, i32
  }
}

</mosaic_0001>

<llo_original>
// kernel: tpu_custom_call.1
$region0: #{tpu_custom_call.1}
  #allocation0 [shape = 'u32[]', space=smem, size = 0x4, offset = 0x4, fixed_abs, tag = 'smem constant byte address 0x4 - core index']
  #allocation1 [shape = 'u32[72,128]{1,0:T(1,128)}', space=vmem, size = 0x9000, scoped, tag = 'internal scratch']
  %s0 = inlined_call_operand.vmem [shape: f32[16,1], index: 0, kind: input, shape index: {}]
  %s1 = inlined_call_operand.vmem [shape: f32[2,128], index: 1, kind: input, shape index: {}]
  %s2 = inlined_call_operand.hbm [shape: f32[128,128], index: 2, kind: input, shape index: {}]
  %s3 = inlined_call_operand.vmem [shape: f32[1,128], index: 3, kind: input, shape index: {}]
  %s4 = inlined_call_operand.hbm [shape: f32[16,128], index: 4, kind: output, shape index: {}]
  %s5 = sld [smem:[#allocation0]]
  $region30: #{tpu_custom_call.1} parent=0
    _
  %s7 = ssub.s32 1, %s5
  %s8 = scalar_select 0, %s7, %s5
  $region1: #{tpu_custom_call.1} parent=0
    #allocation2 [shape = 'u8[65536]{0}', space=vmem, size = 0x10000, scoped, tag = 'input window, operand 2, single buffered']
    #allocation3 [shape = 's32[1]{0}', space=sflag, size = 0x4, scoped, tag = 'scoped memory for tpu_custom_call.1']
    #allocation4 [shape = 's32[1]{0}', space=sflag, size = 0x4, scoped, tag = 'scoped memory for tpu_custom_call.1']
    #allocation5 [shape = 'u8[8192]{0}', space=vmem, size = 0x2000, scoped, tag = 'output window, operand 0, single buffered']
    %9 = vsyncpa [#allocation3], 0
    %10 = vsyncpa [#allocation4], 0
    // Predicated region
    $region2: #{tpu_custom_call.1} parent=1 // pred_check
      _
    $region3: #{tpu_custom_call.1} parent=1 // pred_check_branch
      %12 = sbr.rel (0) target = $region5
    $region4: #{tpu_custom_call.1} parent=1 // pred_region
      _
    $region5: #{tpu_custom_call.1} parent=1 // pred_fallthru
      _
    // Predicated region
    $region6: #{tpu_custom_call.1} parent=1 // pred_check
      _
    $region7: #{tpu_custom_call.1} parent=1 // pred_check_branch
      %14 = sbr.rel (0) target = $region9
    $region8: #{tpu_custom_call.1} parent=1 // pred_region
      _
    $region9: #{tpu_custom_call.1} parent=1 // pred_fallthru
      _
    // Predicated region
    $region10: #{tpu_custom_call.1} parent=1 // pred_check
      _
    $region11: #{tpu_custom_call.1} parent=1 // pred_check_branch
      %16 = sbr.rel (0) target = $region13
    $region12: #{tpu_custom_call.1} parent=1 // pred_region
      %18 = vsyncadd [#allocation3], 0
      %s19 = sshll.u32 %s2, 4
      %s20 = int_to_ptr.hbm [resolvable:$true] %s19
      %s21 = sshll.u32 [#allocation2], 4
      %s22 = int_to_ptr.vmem [resolvable:$true] %s21
      %27 = dma.hbm_to_vmem [thread:$0]  %s20, 2048, %s22, [#allocation3], 128, 128, 8
    $region13: #{tpu_custom_call.1} parent=1 // pred_fallthru
      _
    // Predicated region
    $region14: #{tpu_custom_call.1} parent=1 // pred_check
      _
    $region15: #{tpu_custom_call.1} parent=1 // pred_check_branch
      %29 = sbr.rel (0) target = $region17
    $region16: #{tpu_custom_call.1} parent=1 // pred_region
      _
    $region17: #{tpu_custom_call.1} parent=1 // pred_fallthru
      _
    // Predicated region
    $region18: #{tpu_custom_call.1} parent=1 // pred_check
      _
    $region19: #{tpu_custom_call.1} parent=1 // pred_check_branch
      %31 = sbr.rel (0) target = $region21
    $region20: #{tpu_custom_call.1} parent=1 // pred_region
      %33 = dma.done [#allocation3], 2048
    $region21: #{tpu_custom_call.1} parent=1 // pred_fallthru
      _
    %v34 = vld [vmem:[%s0] sm:$0xff]
    %v35 = vld [vmem:[%s0 + $0x8] sm:$0xff]
    %v36 = vld [vmem:[%s1] sm:$0x1]
    %v37 = vld [vmem:[%s1 + $0x1] sm:$0x1]
    %39 = vset.pattern.permute.xlu0 0
    %40 = vperm.xlu0 %39, %v34
    %v41 = vpop.permute.xlu0 %40
    %44 = vset.pattern.permute.xlu0 0
    %45 = vperm.xlu0 %44, %v35
    %v46 = vpop.permute.xlu0 %45
    %v48 = vperm.slane %v36, 0
    %v49 = vmul.f32 %v41, %v48
    %v50 = vmul.f32 %v46, %v48
    %v51 = vperm.slane %v37, 0
    %v52 = vadd.f32 %v49, %v51
    %v53 = vadd.f32 %v50, %v51
    %v54 = vmax.f32 %v52, 0.0
    %v55 = vmax.f32 %v53, 0.0
    %v56 = vld [vmem:[#allocation2] sm:$0xff]
    %v57 = vld [vmem:[#allocation2 + $0x8] sm:$0xff]
    %v58 = vld [vmem:[#allocation2 + $0x10] sm:$0xff]
    %v59 = vld [vmem:[#allocation2 + $0x18] sm:$0xff]
    %v60 = vld [vmem:[#allocation2 + $0x20] sm:$0xff]
    %v61 = vld [vmem:[#allocation2 + $0x28] sm:$0xff]
    %v62 = vld [vmem:[#allocation2 + $0x30] sm:$0xff]
    %v63 = vld [vmem:[#allocation2 + $0x38] sm:$0xff]
    %v64 = vld [vmem:[#allocation2 + $0x40] sm:$0xff]
    %v65 = vld [vmem:[#allocation2 + $0x48] sm:$0xff]
    %v66 = vld [vmem:[#allocation2 + $0x50] sm:$0xff]
    %v67 = vld [vmem:[#allocation2 + $0x58] sm:$0xff]
    %v68 = vld [vmem:[#allocation2 + $0x60] sm:$0xff]
    %v69 = vld [vmem:[#allocation2 + $0x68] sm:$0xff]
    %v70 = vld [vmem:[#allocation2 + $0x70] sm:$0xff]
    %v71 = vld [vmem:[#allocation2 + $0x78] sm:$0xff]
    %v72 = vld [vmem:[%s3] sm:$0x1]
    %v74 = vperm.slane %v72, 0
    %76 = vmatpush.msra.mxu0 %v71
    %77 = vmatpush.msra.mxu0 %v70
    %78 = vmatpush.msra.mxu0 %v69
    %79 = vmatpush.msra.mxu0 %v68
    %80 = vmatpush.msra.mxu0 %v67
    %81 = vmatpush.msra.mxu0 %v66
    %82 = vmatpush.msra.mxu0 %v65
    %83 = vmatpush.msra.mxu0 %v64
    %84 = vmatpush.msra.mxu0 %v63
    %85 = vmatpush.msra.mxu0 %v62
    %86 = vmatpush.msra.mxu0 %v61
    %87 = vmatpush.msra.mxu0 %v60
    %88 = vmatpush.msra.mxu0 %v59
    %89 = vmatpush.msra.mxu0 %v58
    %90 = vmatpush.msra.mxu0 %v57
    %91 = vmatpush.msra.mxu0 %v56
    %92 = vmatmul.f32.gmra.mxu0 %v54
    %v93 = vpop.f32.mrf.mxu0
    %v94 = vadd.f32 %v74, %v93
    %95 = vmatmul.f32.gmra.mxu0 %v55
    %v96 = vpop.f32.mrf.mxu0
    %v97 = vadd.f32 %v74, %v96
    %98 = vdwg.mxu0
    %99 = vst [vmem:[#allocation5] sm:$0xff] %v94
    %100 = vst [vmem:[#allocation5 + $0x8] sm:$0xff] %v97
    // Predicated region
    $region22: #{tpu_custom_call.1} parent=1 // pred_check
      _
    $region23: #{tpu_custom_call.1} parent=1 // pred_check_branch
      %102 = sbr.rel (0) target = $region25
    $region24: #{tpu_custom_call.1} parent=1 // pred_region
      %104 = vsyncadd [#allocation4], 0
      %s105 = sshll.u32 [#allocation5], 4
      %s106 = int_to_ptr.vmem [resolvable:$true] %s105
      %s107 = sshll.u32 %s4, 4
      %s108 = int_to_ptr.hbm [resolvable:$true] %s107
      %113 = dma.vmem_to_hbm [thread:$0]  %s106, 256, %s108, [#allocation4], 128, 128, 8
    $region25: #{tpu_custom_call.1} parent=1 // pred_fallthru
      _
    // Predicated region
    $region26: #{tpu_custom_call.1} parent=1 // pred_check
      _
    $region27: #{tpu_custom_call.1} parent=1 // pred_check_branch
      %115 = sbr.rel (0) target = $region29
    $region28: #{tpu_custom_call.1} parent=1 // pred_region
      %117 = dma.done [#allocation4], 256
    $region29: #{tpu_custom_call.1} parent=1 // pred_fallthru
      _
    %118 = vsyncpa [#allocation3], 1
    %119 = vsyncpa [#allocation4], 1

</llo_original>
